<compile_context>
chip_gen: v7x
topology: tpu7x:2x2x1
jax: 0.10.0
libtpu: 0.0.40
codegen_flags: <defaults>
</compile_context>

<pallas_src>
import functools

import jax
import jax.numpy as jnp
from jax.experimental import pallas as pl
from jax.experimental.pallas import tpu as pltpu


def _round_up(x, m):
    return ((x + m - 1) // m) * m


# ---------------------------------------------------------------------------
# Fused kernel: (folded) patch projection + bias + LayerNorm(embed_dim)
# ---------------------------------------------------------------------------
def _patch_proj_ln_kernel(e_real, x_ref, w_ref, p_ref, o_ref):
    # x_ref: (tm, K) bf16   w_ref: (K, Epad) bf16
    # p_ref: (8, Epad) f32, rows = [bias, gamma, beta, 0...]   o_ref: (tm, Epad) bf16
    # Columns >= e_real are zero in w / bias / gamma / beta, so y and the output stay 0 there.
    y = jnp.dot(x_ref[...], w_ref[...], preferred_element_type=jnp.float32)
    y = y + p_ref[0:1, :]                                     # conv bias (0 in padded cols)

    inv_e = 1.0 / float(e_real)
    # Moment-form LayerNorm stats: padded cols of y are exactly 0, so full-Epad sums == real-E sums.
    mu = jnp.sum(y, axis=-1, keepdims=True) * inv_e
    var = jnp.maximum(jnp.sum(y * y, axis=-1, keepdims=True) * inv_e - mu * mu, 0.0)
    yn = (y - mu) * jax.lax.rsqrt(var + 1e-5)                 # PyTorch LayerNorm eps

    # gamma/beta are 0 in padded cols -> padded output cols stay 0 (sliced off outside).
    o_ref[...] = (yn * p_ref[1:2, :] + p_ref[2:3, :]).astype(o_ref.dtype)


def _choose_tm(M, K, Epad, in_bytes, out_bytes, *, tm_cap=2048, vmem_budget=32 << 20):
    """Pick the row tile: biggest multiple of 8 fitting the VMEM budget, >=2 grid steps if M allows."""
    fixed = 2 * K * Epad * in_bytes + 2 * 8 * Epad * 4        # dbl-buffered weights + param slab
    per_row = 2 * (K * in_bytes + Epad * out_bytes)           # dbl-buffered lhs block + out block
    tm = max(8, min(tm_cap, (vmem_budget - fixed) // per_row))
    tm = min(tm, _round_up(M, 8))
    if M >= 16:                                               # v7x: 2 TCs -> keep grid_m >= 2
        tm = min(tm, _round_up(pl.cdiv(M, 2), 8))
    return int(max(8, (tm // 8) * 8))


def patch_proj_ln(patches, w_mat, bias, gamma, beta):
    """patches: (M, K) bf16; w_mat: (K, E) bf16; bias/gamma/beta: (E,) -> (M, Epad) bf16."""
    M, K = patches.shape
    E = w_mat.shape[1]
    # Lane-dense output columns; production embed dims (>=256) get full 256-wide MXU result tiles.
    Epad = _round_up(E, 256) if E >= 256 else 128

    # Zero-pad the (tiny) parameters along E and merge the affine params into one slab (single DMA).
    w_p = jnp.zeros((K, Epad), w_mat.dtype).at[:, :E].set(w_mat)
    slab = jnp.zeros((8, Epad), jnp.float32)
    slab = slab.at[0, :E].set(bias.astype(jnp.float32))
    slab = slab.at[1, :E].set(gamma.astype(jnp.float32))
    slab = slab.at[2, :E].set(beta.astype(jnp.float32))

    in_b = patches.dtype.itemsize
    out_b = jnp.dtype(jnp.bfloat16).itemsize
    tm = _choose_tm(M, K, Epad, in_b, out_b)
    grid_m = pl.cdiv(M, tm)
    # No jnp.pad on M: the ragged last block is handled by Pallas (OOB input rows are garbage but
    # per-row independent; OOB output rows are dropped and never materialized).

    kernel = functools.partial(_patch_proj_ln_kernel, E)
    cost = pl.CostEstimate(
        flops=2 * M * K * Epad,
        transcendentals=0,
        bytes_accessed=M * K * in_b + K * Epad * in_b + M * Epad * out_b,
    )
    out = pl.pallas_call(
        kernel,
        out_shape=jax.ShapeDtypeStruct((M, Epad), jnp.bfloat16),
        grid_spec=pltpu.PrefetchScalarGridSpec(
            num_scalar_prefetch=0,
            grid=(grid_m,),
            in_specs=[
                pl.BlockSpec((tm, K), lambda i: (i, 0)),
                pl.BlockSpec((K, Epad), lambda i: (0, 0)),
                pl.BlockSpec((8, Epad), lambda i: (0, 0)),
            ],
            out_specs=pl.BlockSpec((tm, Epad), lambda i: (i, 0)),
        ),
        compiler_params=pltpu.CompilerParams(
            dimension_semantics=("parallel",),        # shards the row-tile axis across TCs on v7x
            vmem_limit_bytes=48 * 1024 * 1024,        # budget in _choose_tm keeps us well under this
        ),
        cost_estimate=cost,
    )(patches, w_p, slab)
    return out


# ---------------------------------------------------------------------------
# ImageEncoder forward: fold downsample into the conv weight, one rearrange, one kernel.
# ---------------------------------------------------------------------------
def init_image_encoder_params(key, *, num_channels, patch_size, embed_dim):
    (kw,) = jax.random.split(key, 1)
    # Conv2d weight layout matches PyTorch: (E, C, p, p); synthetic trunc-normal-ish init,
    # zero conv bias, LayerNorm gamma=1 / beta=0.
    conv_w = 0.02 * jax.random.normal(
        kw, (embed_dim, num_channels, patch_size, patch_size), dtype=jnp.float32)
    conv_b = jnp.zeros((embed_dim,), jnp.float32)
    ln_g = jnp.ones((embed_dim,), jnp.float32)
    ln_b = jnp.zeros((embed_dim,), jnp.float32)
    return dict(conv_w=conv_w, conv_b=conv_b, ln_g=ln_g, ln_b=ln_b)


def image_encoder_forward(vid, params, *, scale_factor, patch_size):
    B, T, C, H, W = vid.shape
    img = vid.reshape(B * T, C, H, W)                        # flatten(vid, ndim=4)

    s = int(round(float(scale_factor)))
    if abs(float(scale_factor) - s) > 1e-9 or s not in (1, 2):
        raise NotImplementedError("only scale factors 1 and 2 wired up in this synthetic script")
    if s == 2:
        # Exact fold requires align_corners=False, antialias=False (F.interpolate defaults)
        # and even H, W: then the 0.5x bilinear resample is a plain 2x2 mean.
        assert H % 2 == 0 and W % 2 == 0, "even H, W required for exact 0.5x bilinear fold"

    p = patch_size
    pe = p * s                                               # effective patch at original res
    assert H % pe == 0 and W % pe == 0
    E = params["conv_w"].shape[0]
    N = B * T
    Hp, Wp = H // pe, W // pe

    # Fold the (linear) downsample into the conv weight:
    #   w_fold[e, c, s*a + da, s*b + db] = conv_w[e, c, a, b] / s^2
    w = params["conv_w"] / float(s * s)
    if s > 1:
        w = jnp.repeat(jnp.repeat(w, s, axis=2), s, axis=3)  # (E, C, pe, pe)
    w_mat = w.reshape(E, C * pe * pe).T.astype(jnp.bfloat16)  # (K, E), K = C*pe*pe

    # Single HBM rearrange, fused with the bf16 cast: non-overlapping pe x pe patches, (c,a,b) order.
    patches = (img.reshape(N, C, Hp, pe, Wp, pe)
                  .transpose(0, 2, 4, 1, 3, 5)
                  .reshape(N * Hp * Wp, C * pe * pe)
                  .astype(jnp.bfloat16))

    out = patch_proj_ln(patches, w_mat, params["conv_b"],
                        params["ln_g"], params["ln_b"])       # (M, Epad) bf16
    tokens = out[:, :E].astype(vid.dtype)                     # one small fused slice+cast pass
    return tokens.reshape(B, T, Hp * Wp, E)                   # unflatten(x, (B, T))


# ---------------------------------------------------------------------------
# Pure-JAX reference (downsample-then-conv-then-LN) to validate the weight fold.
# ---------------------------------------------------------------------------
def reference_forward(vid, params, *, scale_factor, patch_size):
    B, T, C, H, W = vid.shape
    img = vid.reshape(B * T, C, H, W)
    s = int(round(float(scale_factor)))
    if s == 2:
        img = img.reshape(B * T, C, H // 2, 2, W // 2, 2).mean(axis=(3, 5))
    N, C2, Hs, Ws = img.shape
    p = patch_size
    Hp, Wp = Hs // p, Ws // p
    E = params["conv_w"].shape[0]
    patches = (img.reshape(N, C2, Hp, p, Wp, p)
                  .transpose(0, 2, 4, 1, 3, 5)
                  .reshape(N * Hp * Wp, C2 * p * p))
    y = jnp.dot(patches, params["conv_w"].reshape(E, -1).T,
                precision=jax.lax.Precision.HIGHEST) + params["conv_b"][None, :]
    mu = jnp.mean(y, axis=-1, keepdims=True)
    var = jnp.mean((y - mu) ** 2, axis=-1, keepdims=True)
    yn = (y - mu) * jax.lax.rsqrt(var + 1e-5)
    out = yn * params["ln_g"][None, :] + params["ln_b"][None, :]
    return out.reshape(B, T, Hp * Wp, E)


if __name__ == "__main__":
    # opt: load_dim=32, dim=16 -> scale_factor=2 ; patch_size=4 ; embed_dim=32 ; dtype='RGB' -> C=3
    B, T, C, H, W = 2, 2, 3, 32, 32
    patch_size, embed_dim, scale_factor = 4, 32, 2

    key = jax.random.PRNGKey(0)
    k_vid, k_par = jax.random.split(key)
    vid = jax.random.normal(k_vid, (B, T, C, H, W), dtype=jnp.float32)
    params = init_image_encoder_params(
        k_par, num_channels=C, patch_size=patch_size, embed_dim=embed_dim)

    fwd = jax.jit(functools.partial(
        image_encoder_forward, scale_factor=scale_factor, patch_size=patch_size))
    out = fwd(vid, params)
    jax.block_until_ready(out)

    n_tok = (H // scale_factor // patch_size) * (W // scale_factor // patch_size)
    assert out.shape == (B, T, n_tok, embed_dim)

    ref = reference_forward(vid, params, scale_factor=scale_factor, patch_size=patch_size)
    max_err = float(jnp.max(jnp.abs(out - ref)))
    # bf16 matmul operands + bf16 kernel output vs the HIGHEST-precision f32 reference.
    assert jnp.allclose(out, ref, atol=5e-2, rtol=5e-2), max_err

    print("KERNEL_OK")
</pallas_src>

<mosaic_0001>
module attributes {stable_mosaic.version = 11 : i64} {
  func.func @_patch_proj_ln_kernel(%arg0: i32, %arg1: memref<32x192xbf16, #tpu.memory_space<vmem>>, %arg2: memref<192x128xbf16, #tpu.memory_space<vmem>>, %arg3: memref<8x128xf32, #tpu.memory_space<vmem>>, %arg4: memref<32x128xbf16, #tpu.memory_space<vmem>>) attributes {dimension_semantics = [#tpu.dimension_semantics<parallel>], iteration_bounds = array<i64: 2>, scalar_prefetch = 0 : i64, scratch_operands = 0 : i64, tpu.core_type = #tpu.core_type<tc>, window_params = [{transform_indices = @transform_0, window_bounds = array<i64: 32, 192>}, {pipeline_mode = #tpu.pipeline_mode<synchronous>, transform_indices = @transform_1, window_bounds = array<i64: 192, 128>}, {pipeline_mode = #tpu.pipeline_mode<synchronous>, transform_indices = @transform_2, window_bounds = array<i64: 8, 128>}, {transform_indices = @transform_3, window_bounds = array<i64: 32, 128>}]} {
    %c0 = arith.constant 0 : index
    %c0_0 = arith.constant 0 : index
    %0 = vector.load %arg1[%c0, %c0_0] : memref<32x192xbf16, #tpu.memory_space<vmem>>, vector<32x192xbf16>
    %c0_1 = arith.constant 0 : index
    %c0_2 = arith.constant 0 : index
    %1 = vector.load %arg2[%c0_1, %c0_2] : memref<192x128xbf16, #tpu.memory_space<vmem>>, vector<192x128xbf16>
    %cst = arith.constant dense<0.000000e+00> : vector<32x128xf32>
    %2 = tpu.matmul %0, %1, %cst {dimension_numbers = #tpu.dot_dimension_numbers<[1], [0], [0], [1], [0, 0, 1, 1], [], []>} : vector<32x192xbf16>, vector<192x128xbf16>, vector<32x128xf32> -> vector<32x128xf32>
    %c0_3 = arith.constant 0 : index
    %c0_4 = arith.constant 0 : index
    %3 = vector.load %arg3[%c0_3, %c0_4] : memref<8x128xf32, #tpu.memory_space<vmem>>, vector<1x128xf32>
    %4 = vector.broadcast %3 : vector<1x128xf32> to vector<32x128xf32>
    %5 = arith.addf %2, %4 : vector<32x128xf32>
    %cst_5 = arith.constant dense<0.000000e+00> : vector<32xf32>
    %6 = vector.multi_reduction <add>, %5, %cst_5 [1] : vector<32x128xf32> to vector<32xf32>
    %7 = vector.shape_cast %6 : vector<32xf32> to vector<32x1xf32>
    %cst_6 = arith.constant 3.125000e-02 : f32
    %8 = vector.broadcast %cst_6 : f32 to vector<32x1xf32>
    %9 = arith.mulf %7, %8 : vector<32x1xf32>
    %10 = arith.mulf %5, %5 : vector<32x128xf32>
    %cst_7 = arith.constant dense<0.000000e+00> : vector<32xf32>
    %11 = vector.multi_reduction <add>, %10, %cst_7 [1] : vector<32x128xf32> to vector<32xf32>
    %12 = vector.shape_cast %11 : vector<32xf32> to vector<32x1xf32>
    %cst_8 = arith.constant 3.125000e-02 : f32
    %13 = vector.broadcast %cst_8 : f32 to vector<32x1xf32>
    %14 = arith.mulf %12, %13 : vector<32x1xf32>
    %15 = arith.mulf %9, %9 : vector<32x1xf32>
    %16 = arith.subf %14, %15 : vector<32x1xf32>
    %cst_9 = arith.constant 0.000000e+00 : f32
    %17 = vector.broadcast %cst_9 : f32 to vector<32x1xf32>
    %18 = arith.maximumf %16, %17 : vector<32x1xf32>
    %19 = vector.broadcast %9 : vector<32x1xf32> to vector<32x128xf32>
    %20 = arith.subf %5, %19 : vector<32x128xf32>
    %cst_10 = arith.constant 9.99999974E-6 : f32
    %21 = vector.broadcast %cst_10 : f32 to vector<32x1xf32>
    %22 = arith.addf %18, %21 : vector<32x1xf32>
    %23 = math.rsqrt %22 : vector<32x1xf32>
    %24 = vector.broadcast %23 : vector<32x1xf32> to vector<32x128xf32>
    %25 = arith.mulf %20, %24 : vector<32x128xf32>
    %c1 = arith.constant 1 : index
    %c0_11 = arith.constant 0 : index
    %26 = vector.load %arg3[%c1, %c0_11] : memref<8x128xf32, #tpu.memory_space<vmem>>, vector<1x128xf32>
    %27 = vector.broadcast %26 : vector<1x128xf32> to vector<32x128xf32>
    %28 = arith.mulf %25, %27 : vector<32x128xf32>
    %c2 = arith.constant 2 : index
    %c0_12 = arith.constant 0 : index
    %29 = vector.load %arg3[%c2, %c0_12] : memref<8x128xf32, #tpu.memory_space<vmem>>, vector<1x128xf32>
    %30 = vector.broadcast %29 : vector<1x128xf32> to vector<32x128xf32>
    %31 = arith.addf %28, %30 : vector<32x128xf32>
    %32 = arith.truncf %31 : vector<32x128xf32> to vector<32x128xbf16>
    %c0_13 = arith.constant 0 : index
    %c0_14 = arith.constant 0 : index
    %33 = vector.load %arg4[%c0_13, %c0_14] : memref<32x128xbf16, #tpu.memory_space<vmem>>, vector<32x128xbf16>
    tpu.vector_store %arg4[%c0_13, %c0_14], %32 {strides = array<i32>} : memref<32x128xbf16, #tpu.memory_space<vmem>>, vector<32x128xbf16>,
    return
  }
  func.func @transform_0(%arg0: i32) -> (i32, i32) {
    %c0_i32 = arith.constant 0 : i32
    %c0_i32_0 = arith.constant 0 : i32
    return %arg0, %c0_i32 : i32, i32
  }
  func.func @transform_1(%arg0: i32) -> (i32, i32) {
    %c0_i32 = arith.constant 0 : i32
    %c0_i32_0 = arith.constant 0 : i32
    %c0_i32_1 = arith.constant 0 : i32
    return %c0_i32, %c0_i32_0 : i32, i32
  }
  func.func @transform_2(%arg0: i32) -> (i32, i32) {
    %c0_i32 = arith.constant 0 : i32
    %c0_i32_0 = arith.constant 0 : i32
    %c0_i32_1 = arith.constant 0 : i32
    return %c0_i32, %c0_i32_0 : i32, i32
  }
  func.func @transform_3(%arg0: i32) -> (i32, i32) {
    %c0_i32 = arith.constant 0 : i32
    %c0_i32_0 = arith.constant 0 : i32
    return %arg0, %c0_i32 : i32, i32
  }
}

</mosaic_0001>

<llo_original>
// kernel: image_encoder_forward.1
$region0: #{image_encoder_forward.1}
  #allocation0 [shape = 'u32[]', space=smem, size = 0x4, offset = 0x4, fixed_abs, tag = 'smem constant byte address 0x4 - core index']
  #allocation1 [shape = 'u32[144,128]{1,0:T(1,128)}', space=vmem, size = 0x12000, scoped, tag = 'internal scratch']
  %s0 = inlined_call_operand.vmem [shape: bf16[64,192], index: 0, kind: input, shape index: {}]
  %s1 = inlined_call_operand.vmem [shape: bf16[192,128], index: 1, kind: input, shape index: {}]
  %s2 = inlined_call_operand.vmem [shape: f32[8,128], index: 2, kind: input, shape index: {}]
  %s3 = inlined_call_operand.vmem [shape: bf16[64,128], index: 3, kind: output, shape index: {}]
  %s4 = sld [smem:[#allocation0]]
  $region45: #{image_encoder_forward.1} parent=0
    _
  %s6 = ssub.s32 1, %s4
  %s7 = scalar_select 0, %s6, %s4
  loop: start=0, step=1, limit=4
  $region2: #{image_encoder_forward.1} parent=0 // loop_pre_header
    _
  $region3: #{image_encoder_forward.1} parent=0 // loop_header
    %s9 = sphi 0, %s13
    %p10 = scmp.ge.s32.totalorder %s9, 4
    %s19 = sphi 0, %s21
    %s22 = sphi 0, %s19
    %s23 = sphi 0, %s22
    %s39 = sphi 0, %s23
    %s43 = sphi 0, %s43
    %s45 = sphi 0, %s43
    %s46 = sphi 0, %s45
    %s60 = sphi 0, %s46
    %s64 = sphi 0, %s64
    %s66 = sphi 0, %s64
    %s67 = sphi 0, %s66
    %s81 = sphi 0, %s67
    %s87 = sphi 0, %s89
    %s90 = sphi 0, %s87
    %s91 = sphi 0, %s90
    %s107 = sphi 0, %s91
  $region4: #{image_encoder_forward.1} parent=0 // loop_header_branch
    %12 = sbr.rel (%p10) target = $region8
  $region5: #{image_encoder_forward.1} parent=0 // loop_body
    %s14 = ssub.s32 %s9, 1
    %s15 = ssub.s32 %s9, 2
    %s16 = sadd.s32 %s9, 1
    %s17 = ssub.s32 %s9, %s16
    %p18 = scmp.eq.s32.totalorder %s17, 0
    %s20 = sadd.s32 %s19, 1
    %s21 = scalar_select %p18, %s19, %s20
    %p24 = pneg %p18
    %p25 = scmp.eq.s32.totalorder %s9, 1
    %p26 = por %p24, %p25
    %p27 = scmp.ne.s32.totalorder %s19, %s22
    %p28 = scmp.eq.s32.totalorder %s9, 0
    %p29 = por %p27, %p28
    %p30 = scmp.ne.s32.totalorder %s19, %s22
    %p31 = scmp.eq.s32.totalorder %s14, 1
    %p32 = por %p30, %p31
    %p33 = scmp.ne.s32.totalorder %s22, %s23
    %p34 = scmp.eq.s32.totalorder %s14, 0
    %p35 = por %p33, %p34
    %p36 = scmp.ne.s32.totalorder %s22, %s23
    %p37 = scmp.eq.s32.totalorder %s15, 1
    %p38 = por %p36, %p37
    %p40 = scmp.ne.s32.totalorder %s23, %s39
    %p41 = scmp.eq.s32.totalorder %s15, 0
    %p42 = por %p40, %p41
    %s44 = sadd.s32 %s43, 1
    %p47 = scmp.eq.s32.totalorder %s9, 1
    %p48 = scmp.ne.s32.totalorder %s43, %s45
    %p49 = scmp.eq.s32.totalorder %s9, 0
    %p50 = por %p48, %p49
    %p51 = scmp.ne.s32.totalorder %s43, %s45
    %p52 = scmp.eq.s32.totalorder %s14, 1
    %p53 = por %p51, %p52
    %p54 = scmp.ne.s32.totalorder %s45, %s46
    %p55 = scmp.eq.s32.totalorder %s14, 0
    %p56 = por %p54, %p55
    %p57 = scmp.ne.s32.totalorder %s45, %s46
    %p58 = scmp.eq.s32.totalorder %s15, 1
    %p59 = por %p57, %p58
    %p61 = scmp.ne.s32.totalorder %s46, %s60
    %p62 = scmp.eq.s32.totalorder %s15, 0
    %p63 = por %p61, %p62
    %s65 = sadd.s32 %s64, 1
    %p68 = scmp.eq.s32.totalorder %s9, 1
    %p69 = scmp.ne.s32.totalorder %s64, %s66
    %p70 = scmp.eq.s32.totalorder %s9, 0
    %p71 = por %p69, %p70
    %p72 = scmp.ne.s32.totalorder %s64, %s66
    %p73 = scmp.eq.s32.totalorder %s14, 1
    %p74 = por %p72, %p73
    %p75 = scmp.ne.s32.totalorder %s66, %s67
    %p76 = scmp.eq.s32.totalorder %s14, 0
    %p77 = por %p75, %p76
    %p78 = scmp.ne.s32.totalorder %s66, %s67
    %p79 = scmp.eq.s32.totalorder %s15, 1
    %p80 = por %p78, %p79
    %p82 = scmp.ne.s32.totalorder %s67, %s81
    %p83 = scmp.eq.s32.totalorder %s15, 0
    %p84 = por %p82, %p83
    %s85 = ssub.s32 %s9, %s16
    %p86 = scmp.eq.s32.totalorder %s85, 0
    %s88 = sadd.s32 %s87, 1
    %s89 = scalar_select %p86, %s87, %s88
    %p92 = pneg %p86
    %p93 = scmp.eq.s32.totalorder %s9, 1
    %p94 = por %p92, %p93
    %p95 = scmp.ne.s32.totalorder %s87, %s90
    %p96 = scmp.eq.s32.totalorder %s9, 0
    %p97 = por %p95, %p96
    %p98 = scmp.ne.s32.totalorder %s87, %s90
    %p99 = scmp.eq.s32.totalorder %s14, 1
    %p100 = por %p98, %p99
    %p101 = scmp.ne.s32.totalorder %s90, %s91
    %p102 = scmp.eq.s32.totalorder %s14, 0
    %p103 = por %p101, %p102
    %p104 = scmp.ne.s32.totalorder %s90, %s91
    %p105 = scmp.eq.s32.totalorder %s15, 1
    %p106 = por %p104, %p105
    %p108 = scmp.ne.s32.totalorder %s91, %s107
    %p109 = scmp.eq.s32.totalorder %s15, 0
    %p110 = por %p108, %p109
    %p111 = scmp.le.s32.totalorder 1, %s9
    %p112 = scmp.lt.s32.totalorder %s9, 3
    %p113 = pnand %p111, %p112
    %p114 = pneg %p113
    // Predicated region
    $region9: #{image_encoder_forward.1} parent=5 // pred_check
      _
    $region10: #{image_encoder_forward.1} parent=5 // pred_check_branch
      %116 = sbr.rel (%p113) target = $region12
    $region11: #{image_encoder_forward.1} parent=5 // pred_region
      %s117 = ssub.s32 %s9, 1
      // Predicated region
      $region13: #{image_encoder_forward.1} parent=11 // pred_check
        %p118 = pneg %p56
      $region14: #{image_encoder_forward.1} parent=11 // pred_check_branch
        %120 = sbr.rel (%p118) target = $region16
      $region15: #{image_encoder_forward.1} parent=11 // pred_region
        _
      $region16: #{image_encoder_forward.1} parent=11 // pred_fallthru
        _
      // Predicated region
      $region17: #{image_encoder_forward.1} parent=11 // pred_check
        %p121 = pneg %p77
      $region18: #{image_encoder_forward.1} parent=11 // pred_check_branch
        %123 = sbr.rel (%p121) target = $region20
      $region19: #{image_encoder_forward.1} parent=11 // pred_region
        _
      $region20: #{image_encoder_forward.1} parent=11 // pred_fallthru
        _
    $region12: #{image_encoder_forward.1} parent=5 // pred_fallthru
      _
    %p124 = scmp.lt.s32.totalorder %s9, 2
    // Predicated region
    $region21: #{image_encoder_forward.1} parent=5 // pred_check
      %p125 = pneg %p124
    $region22: #{image_encoder_forward.1} parent=5 // pred_check_branch
      %127 = sbr.rel (%p125) target = $region24
    $region23: #{image_encoder_forward.1} parent=5 // pred_region
      // Predicated region
      $region25: #{image_encoder_forward.1} parent=23 // pred_check
        %p128 = pneg %p29
      $region26: #{image_encoder_forward.1} parent=23 // pred_check_branch
        %130 = sbr.rel (%p128) target = $region28
      $region27: #{image_encoder_forward.1} parent=23 // pred_region
        %s131 = smul.u32 4, %s9
        %p132 = scmp.lt.s32.totalorder %s131, 7
        %s133 = scalar_select %p132, %s131, 7
        %s134 = smul.addr %s133, 2
        %s135 = smul.addr %s134, 4
        %s136 = scalar_lea.vmem %s0, %s135
        %s137 = smul.u32 4, %s9
      $region28: #{image_encoder_forward.1} parent=23 // pred_fallthru
        _
    $region24: #{image_encoder_forward.1} parent=5 // pred_fallthru
      _
    %p138 = scmp.le.s32.totalorder 1, %s9
    %p139 = scmp.lt.s32.totalorder %s9, 3
    %p140 = pnand %p138, %p139
    %p141 = pneg %p140
    // Predicated region
    $region29: #{image_encoder_forward.1} parent=5 // pred_check
      _
    $region30: #{image_encoder_forward.1} parent=5 // pred_check_branch
      %143 = sbr.rel (%p140) target = $region32
    $region31: #{image_encoder_forward.1} parent=5 // pred_region
      %s144 = ssub.s32 %s9, 1
      %s145 = smul.u32 4, %s14
      %p146 = scmp.lt.s32.totalorder %s145, 7
      %s147 = scalar_select %p146, %s145, 7
      %s148 = smul.addr %s147, 2
      %s149 = smul.addr %s148, 4
      %s150 = scalar_lea.vmem %s0, %s149
      %p151 = pneg %p35
      %p152 = pneg %p32
      %p153 = pneg %p56
      %p154 = pneg %p53
      %p155 = pneg %p77
      %p156 = pneg %p74
      %p157 = pneg %p103
      %p158 = pneg %p100
      %s159 = smul.u32 4, %s14
      %p160 = scmp.lt.s32.totalorder %s159, 7
      %s161 = scalar_select %p160, %s159, 7
      %s162 = smul.addr %s161, 4
      %s163 = scalar_lea.vmem %s3, %s162
      %s164 = smul.u32 4, %s14
      %p165 = scmp.lt.s32.totalorder %s164, 7
      %s166 = scalar_select %p165, %s164, 7
      %s167 = smul.addr %s166, 2
      %s168 = smul.addr %s167, 4
      %s169 = scalar_lea.vmem %s0, %s168
      %s170 = smul.u32 4, %s14
      %s171 = smul.u32 4, %s14
      %p172 = scmp.lt.s32.totalorder %s171, 7
      %s173 = scalar_select %p172, %s171, 7
      %s174 = smul.addr %s173, 4
      %s175 = scalar_lea.vmem %s3, %s174
      %s176 = smul.u32 4, %s14
      %v178 = vld [vmem:[%s169] sm:$0xff]
      %v179 = vld [vmem:[%s169 + $0x8] sm:$0xff]
      %v180 = vld [vmem:[%s169 + $0x10] sm:$0xff]
      %v181 = vld [vmem:[%s169 + $0x18] sm:$0xff]
      %v182 = vld [vmem:[%s1] sm:$0xf]
      %v183 = vld [vmem:[%s1 + $0x4] sm:$0xf]
      %v184 = vld [vmem:[%s1 + $0x8] sm:$0xf]
      %v185 = vld [vmem:[%s1 + $0xc] sm:$0xf]
      %v186 = vld [vmem:[%s1 + $0x10] sm:$0xf]
      %v187 = vld [vmem:[%s1 + $0x14] sm:$0xf]
      %v188 = vld [vmem:[%s1 + $0x18] sm:$0xf]
      %v189 = vld [vmem:[%s1 + $0x1c] sm:$0xf]
      %v190 = vld [vmem:[%s1 + $0x20] sm:$0xf]
      %v191 = vld [vmem:[%s1 + $0x24] sm:$0xf]
      %v192 = vld [vmem:[%s1 + $0x28] sm:$0xf]
      %v193 = vld [vmem:[%s1 + $0x2c] sm:$0xf]
      %v194 = vld [vmem:[%s1 + $0x30] sm:$0xf]
      %v195 = vld [vmem:[%s1 + $0x34] sm:$0xf]
      %v196 = vld [vmem:[%s1 + $0x38] sm:$0xf]
      %v197 = vld [vmem:[%s1 + $0x3c] sm:$0xf]
      %v198 = vld [vmem:[%s1 + $0x40] sm:$0xf]
      %v199 = vld [vmem:[%s1 + $0x44] sm:$0xf]
      %v200 = vld [vmem:[%s1 + $0x48] sm:$0xf]
      %v201 = vld [vmem:[%s1 + $0x4c] sm:$0xf]
      %v202 = vld [vmem:[%s1 + $0x50] sm:$0xf]
      %v203 = vld [vmem:[%s1 + $0x54] sm:$0xf]
      %v204 = vld [vmem:[%s1 + $0x58] sm:$0xf]
      %v205 = vld [vmem:[%s1 + $0x5c] sm:$0xf]
      %v206 = vld [vmem:[%s2] sm:$0x1]
      %v207 = vlaneseq
      %v208 = vshrl.u32 %v207, 7
      %v209 = vsub.s32 0, %v208
      %v210 = vrot.slane %v206, %v209
      %v215 = vunpack.c.l.b16 %v178
      %v216 = vunpack.c.h.b16 %v178
      %v217 = vunpack.c.l.b16 %v179
      %v218 = vunpack.c.h.b16 %v179
      %v219 = vunpack.c.l.b16 %v180
      %v220 = vunpack.c.h.b16 %v180
      %v221 = vunpack.c.l.b16 %v181
      %v222 = vunpack.c.h.b16 %v181
      %v223 = vpack.c.b16 %v217, %v215
      %v224 = vpack.c.b16 %v218, %v216
      %v225 = vpack.c.b16 %v221, %v219
      %v226 = vpack.c.b16 %v222, %v220
      %v253 = vunpack.c.l.b16 %v182
      %v254 = vunpack.c.l.b16 %v183
      %v255 = vunpack.c.l.b16 %v184
      %v256 = vunpack.c.l.b16 %v185
      %v257 = vunpack.c.l.b16 %v186
      %v258 = vunpack.c.l.b16 %v187
      %v259 = vunpack.c.l.b16 %v188
      %v260 = vunpack.c.l.b16 %v189
      %v261 = vunpack.c.l.b16 %v190
      %v262 = vunpack.c.l.b16 %v191
      %v263 = vunpack.c.l.b16 %v192
      %v264 = vunpack.c.l.b16 %v193
      %v265 = vunpack.c.l.b16 %v194
      %v266 = vunpack.c.l.b16 %v195
      %v267 = vunpack.c.l.b16 %v196
      %v268 = vunpack.c.l.b16 %v197
      %v269 = vunpack.c.l.b16 %v198
      %v270 = vunpack.c.l.b16 %v199
      %v271 = vunpack.c.l.b16 %v200
      %v272 = vunpack.c.l.b16 %v201
      %v273 = vunpack.c.l.b16 %v202
      %v274 = vunpack.c.l.b16 %v203
      %v275 = vunpack.c.l.b16 %v204
      %v276 = vunpack.c.l.b16 %v205
      %v277 = vpack.c.b16 %v254, %v253
      %v278 = vpack.c.b16 %v256, %v255
      %v279 = vpack.c.b16 %v258, %v257
      %v280 = vpack.c.b16 %v260, %v259
      %v281 = vpack.c.b16 %v262, %v261
      %v282 = vpack.c.b16 %v264, %v263
      %v283 = vpack.c.b16 %v266, %v265
      %v284 = vpack.c.b16 %v268, %v267
      %v285 = vpack.c.b16 %v270, %v269
      %v286 = vpack.c.b16 %v272, %v271
      %v287 = vpack.c.b16 %v274, %v273
      %v288 = vpack.c.b16 %v276, %v275
      %vm301 = vcmask 523264
      %v303 = vsel %vm301, %v224, 0
      %v306 = vsel %vm301, %v226, 0
      %308 = vmatprep.subr.bf16.mxu0 0
      %309 = vmatpush1.bf16.msra.mxu0 %v277
      %310 = vmatprep.subr.bf16.mxu0 0
      %311 = vmatpush1.bf16.msra.mxu0 %v278
      %312 = vmatprep.subr.bf16.mxu0 0
      %313 = vmatpush1.bf16.msra.mxu0 %v279
      %314 = vmatprep.subr.bf16.mxu0 0
      %315 = vmatpush1.bf16.msra.mxu0 %v280
      %316 = vmatprep.subr.bf16.mxu0 0
      %317 = vmatpush1.bf16.msra.mxu0 %v281
      %318 = vmatprep.subr.bf16.mxu0 0
      %319 = vmatpush1.bf16.msra.mxu0 %v282
      %320 = vmatprep.subr.bf16.mxu0 0
      %321 = vmatpush1.bf16.msra.mxu0 %v283
      %322 = vmatprep.subr.bf16.mxu0 0
      %323 = vmatpush1.bf16.msra.mxu0 %v284
      %324 = vmatprep.subr.bf16.mxu0 0
      %325 = vmatpush1.bf16.msra.mxu0 %v285
      %326 = vmatprep.subr.bf16.mxu0 0
      %327 = vmatpush1.bf16.msra.mxu0 %v286
      %328 = vmatprep.subr.bf16.mxu0 0
      %329 = vmatpush1.bf16.msra.mxu0 %v287
      %330 = vmatprep.subr.bf16.mxu0 0
      %331 = vmatpush1.bf16.msra.mxu0 %v288
      %332 = vmatprep.subr.bf16.mxu0 0
      %333 = vmatpush1.bf16.msra.mxu0 0
      %334 = vmatprep.subr.bf16.mxu0 0
      %335 = vmatpush1.bf16.msra.mxu0 0
      %336 = vmatprep.subr.bf16.mxu0 0
      %337 = vmatpush1.bf16.msra.mxu0 0
      %338 = vmatprep.subr.bf16.mxu0 0
      %339 = vmatpush1.bf16.msra.mxu0 0
      %340 = vmatprep.mubr.bf16.mxu0 %v303
      %341 = vmatmul.mubr.bf16.gmra.mrb[0].mxu0 %v223
      %v342 = vpop.f32.mrb[0].mxu0
      %v343 = vadd.f32 %v210, %v342
      %v344 = vpop.f32.mrb[0].mxu0
      %v345 = vpop.f32.mrb[0].mxu0
      %v346 = vadd.f32 %v210, %v345
      %v347 = vpop.f32.mrb[0].mxu0
      %348 = vmatprep.mubr.bf16.mxu0 %v306
      %349 = vmatmul.mubr.bf16.gmra.mrb[0].mxu0 %v225
      %v350 = vpop.f32.mrb[0].mxu0
      %v351 = vadd.f32 %v210, %v350
      %v352 = vpop.f32.mrb[0].mxu0
      %v353 = vpop.f32.mrb[0].mxu0
      %v354 = vadd.f32 %v210, %v353
      %v355 = vpop.f32.mrb[0].mxu0
      %356 = vdwg.mxu0
      %357 = vadd.xlane.f32.xlu0 %v343
      %v358 = vpop.xlane.xlu0 %357
      %359 = vadd.xlane.f32.xlu0 %v346
      %v360 = vpop.xlane.xlu0 %359
      %361 = vadd.xlane.f32.xlu0 %v351
      %v362 = vpop.xlane.xlu0 %361
      %363 = vadd.xlane.f32.xlu0 %v354
      %v364 = vpop.xlane.xlu0 %363
      %v365 = vmul.f32 %v358, 0.03125
      %v366 = vmul.f32 %v360, 0.03125
      %v367 = vmul.f32 %v362, 0.03125
      %v368 = vmul.f32 %v364, 0.03125
      %v369 = vmul.f32 %v343, %v343
      %v370 = vmul.f32 %v346, %v346
      %v371 = vmul.f32 %v351, %v351
      %v372 = vmul.f32 %v354, %v354
      %373 = vadd.xlane.f32.xlu0 %v369
      %v374 = vpop.xlane.xlu0 %373
      %375 = vadd.xlane.f32.xlu0 %v370
      %v376 = vpop.xlane.xlu0 %375
      %377 = vadd.xlane.f32.xlu0 %v371
      %v378 = vpop.xlane.xlu0 %377
      %379 = vadd.xlane.f32.xlu0 %v372
      %v380 = vpop.xlane.xlu0 %379
      %v381 = vmul.f32 %v374, 0.03125
      %v382 = vmul.f32 %v376, 0.03125
      %v383 = vmul.f32 %v378, 0.03125
      %v384 = vmul.f32 %v380, 0.03125
      %v385 = vmul.f32 %v365, %v365
      %v386 = vmul.f32 %v366, %v366
      %v387 = vmul.f32 %v367, %v367
      %v388 = vmul.f32 %v368, %v368
      %v389 = vsub.f32 %v381, %v385
      %v390 = vsub.f32 %v382, %v386
      %v391 = vsub.f32 %v383, %v387
      %v392 = vsub.f32 %v384, %v388
      %v393 = vmax.f32 %v389, 0.0
      %v394 = vmax.f32 %v390, 0.0
      %v395 = vmax.f32 %v391, 0.0
      %v396 = vmax.f32 %v392, 0.0
      %v397 = vsub.f32 %v343, %v365
      %v398 = vsub.f32 %v346, %v366
      %v399 = vsub.f32 %v351, %v367
      %v400 = vsub.f32 %v354, %v368
      %v401 = vadd.f32 %v393, 1e-05
      %v402 = vadd.f32 %v394, 1e-05
      %v403 = vadd.f32 %v395, 1e-05
      %v404 = vadd.f32 %v396, 1e-05
      %v405 = vrsqrt.pop %v401
      %v406 = vrsqrt.pop %v402
      %v407 = vrsqrt.pop %v403
      %v408 = vrsqrt.pop %v404
      %v409 = vmul.f32 %v397, %v405
      %v410 = vmul.f32 %v398, %v406
      %v411 = vmul.f32 %v399, %v407
      %v412 = vmul.f32 %v400, %v408
      %v413 = vld [vmem:[%s2 + $0x1] sm:$0x1]
      %v414 = vlaneseq
      %v415 = vshrl.u32 %v414, 7
      %v416 = vsub.s32 0, %v415
      %v417 = vrot.slane %v413, %v416
      %v418 = vmul.f32 %v409, %v417
      %v419 = vmul.f32 %v410, %v417
      %v420 = vmul.f32 %v411, %v417
      %v421 = vmul.f32 %v412, %v417
      %v422 = vld [vmem:[%s2 + $0x2] sm:$0x1]
      %v423 = vlaneseq
      %v424 = vshrl.u32 %v423, 7
      %v425 = vsub.s32 0, %v424
      %v426 = vrot.slane %v422, %v425
      %v427 = vadd.f32 %v418, %v426
      %v428 = vadd.f32 %v419, %v426
      %v429 = vadd.f32 %v420, %v426
      %v430 = vadd.f32 %v421, %v426
      %v431 = vpack.c.bf16 %v428, %v427
      %v432 = vpack.c.bf16 %v430, %v429
      %v435 = vunpack.c.l.b16 %v431
      %v436 = vunpack.c.h.b16 %v431
      %v437 = vunpack.c.l.b16 %v432
      %v438 = vunpack.c.h.b16 %v432
      %v439 = vpack.c.b16 %v435, %v435
      %v440 = vpack.c.b16 %v436, %v436
      %v441 = vpack.c.b16 %v437, %v437
      %v442 = vpack.c.b16 %v438, %v438
      %447 = vst [vmem:[%s175] sm:$0xf] %v439
      %448 = vst [vmem:[%s175 + $0x4] sm:$0xf] %v440
      %449 = vst [vmem:[%s175 + $0x8] sm:$0xf] %v441
      %450 = vst [vmem:[%s175 + $0xc] sm:$0xf] %v442
      %s451 = smul.u32 4, %s14
      %p452 = scmp.lt.s32.totalorder %s451, 7
      %s453 = scalar_select %p452, %s451, 7
      %s454 = smul.addr %s453, 4
      %s455 = scalar_lea.vmem %s3, %s454
      // Predicated region
      $region33: #{image_encoder_forward.1} parent=31 // pred_check
        %p456 = pneg %p100
      $region34: #{image_encoder_forward.1} parent=31 // pred_check_branch
        %458 = sbr.rel (%p456) target = $region36
      $region35: #{image_encoder_forward.1} parent=31 // pred_region
        %s459 = smul.u32 4, %s14
      $region36: #{image_encoder_forward.1} parent=31 // pred_fallthru
        _
    $region32: #{image_encoder_forward.1} parent=5 // pred_fallthru
      _
    %p460 = scmp.le.s32.totalorder 2, %s9
    // Predicated region
    $region37: #{image_encoder_forward.1} parent=5 // pred_check
      %p461 = pneg %p460
    $region38: #{image_encoder_forward.1} parent=5 // pred_check_branch
      %463 = sbr.rel (%p461) target = $region40
    $region39: #{image_encoder_forward.1} parent=5 // pred_region
      %s464 = ssub.s32 %s9, 2
      // Predicated region
      $region41: #{image_encoder_forward.1} parent=39 // pred_check
        %p465 = pneg %p106
      $region42: #{image_encoder_forward.1} parent=39 // pred_check_branch
        %467 = sbr.rel (%p465) target = $region44
      $region43: #{image_encoder_forward.1} parent=39 // pred_region
        %s468 = smul.u32 4, %s15
        %p469 = scmp.lt.s32.totalorder %s468, 7
        %s470 = scalar_select %p469, %s468, 7
        %s471 = smul.addr %s470, 4
        %s472 = scalar_lea.vmem %s3, %s471
      $region44: #{image_encoder_forward.1} parent=39 // pred_fallthru
        _
    $region40: #{image_encoder_forward.1} parent=5 // pred_fallthru
      _
  $region6: #{image_encoder_forward.1} parent=0 // loop_footer
    %s13 = sadd.s32 1, %s9
  $region7: #{image_encoder_forward.1} parent=0 // loop_footer_branch
    %8 = sbr.rel target = $region3
  $region8: #{image_encoder_forward.1} parent=0 // loop_exit
    _

</llo_original>
